<compile_context>
chip_gen: v6e
topology: v6e:2x2x1
jax: 0.10.0
libtpu: 0.0.40
codegen_flags: <defaults>
</compile_context>

<pallas_src>
import functools

import jax
import jax.numpy as jnp
from jax.experimental import pallas as pl
from jax.experimental.pallas import tpu as pltpu

LANE = 128


def _round_up(n, m):
    return ((n + m - 1) // m) * m


def _pad2(a, rows, cols):
    """Zero-pad a 2-D array up to (rows, cols)."""
    pr = rows - a.shape[0]
    pc = cols - a.shape[1]
    if pr == 0 and pc == 0:
        return a
    return jnp.pad(a, ((0, pr), (0, pc)))


def _mlp_kernel(x_ref, w1_ref, b1_ref, w2_ref, b2_ref, w3_ref, b3_ref, o_ref):
    # x @ W1 + b1 -> ReLU -> @ W2 + b2 -> ReLU -> @ W3 + b3   (all lane-dense tiles)
    x = x_ref[...]

    h1 = jnp.dot(x, w1_ref[...], preferred_element_type=jnp.float32) + b1_ref[...]
    h1 = jnp.maximum(h1, 0.0)                      # relu1 (dropout1 = identity, eval)
    h1 = h1.astype(w2_ref.dtype)                   # match MXU input dtype (bf16 path)

    h2 = jnp.dot(h1, w2_ref[...], preferred_element_type=jnp.float32) + b2_ref[...]
    h2 = jnp.maximum(h2, 0.0)                      # relu2 (dropout2 = identity, eval)
    h2 = h2.astype(w3_ref.dtype)

    out = jnp.dot(h2, w3_ref[...], preferred_element_type=jnp.float32) + b3_ref[...]
    o_ref[...] = out.astype(o_ref.dtype)


@functools.partial(jax.jit, static_argnames=("block_b", "matmul_dtype"))
def mlp_forward(x, w1, b1, w2, b2, w3, b3, *, block_b=None, matmul_dtype=None):
    B, D_in = x.shape
    H = w1.shape[1]
    M = w2.shape[1]          # = 50
    D_out = w3.shape[1]

    # Pad feature dims to 128 lanes (zero-fill: identity through ReLU / final dot).
    Hp = _round_up(H, LANE)
    Mp = _round_up(M, LANE)
    Dp = _round_up(D_out, LANE)

    f32 = jnp.float32
    w1p = _pad2(w1.astype(f32), D_in, Hp)
    b1p = _pad2(b1.reshape(1, -1).astype(f32), 1, Hp)
    w2p = _pad2(w2.astype(f32), Hp, Mp)
    b2p = _pad2(b2.reshape(1, -1).astype(f32), 1, Mp)
    w3p = _pad2(w3.astype(f32), Mp, Dp)
    b3p = _pad2(b3.reshape(1, -1).astype(f32), 1, Dp)

    # Optional bf16 MXU path (v6e/v7x): cast matmul inputs, keep f32 accumulation/bias.
    mm_dtype = f32 if matmul_dtype is None else matmul_dtype
    x_mm = x.astype(mm_dtype)
    w1p = w1p.astype(mm_dtype)
    w2p = w2p.astype(mm_dtype)
    w3p = w3p.astype(mm_dtype)

    # Batch tiling: one block for small B (no per-step overhead); 512-row tiles
    # for large B.  Pass block_b explicitly for v7x megacore splits.
    if block_b is None:
        block_b = B if B <= 512 else 512
    block_b = min(block_b, B)
    grid = (pl.cdiv(B, block_b),)

    out_padded = pl.pallas_call(
        _mlp_kernel,
        out_shape=jax.ShapeDtypeStruct((B, Dp), x.dtype),
        grid_spec=pl.GridSpec(
            grid=grid,
            in_specs=[
                pl.BlockSpec((block_b, D_in), lambda i: (i, 0)),
                # Weights/biases: constant index_map -> same block every step
                # (revisited in VMEM, not re-DMAed).
                pl.BlockSpec((D_in, Hp), lambda i: (0, 0)),
                pl.BlockSpec((1, Hp), lambda i: (0, 0)),
                pl.BlockSpec((Hp, Mp), lambda i: (0, 0)),
                pl.BlockSpec((1, Mp), lambda i: (0, 0)),
                pl.BlockSpec((Mp, Dp), lambda i: (0, 0)),
                pl.BlockSpec((1, Dp), lambda i: (0, 0)),
            ],
            out_specs=pl.BlockSpec((block_b, Dp), lambda i: (i, 0)),
        ),
        compiler_params=pltpu.CompilerParams(
            dimension_semantics=("parallel",)),
    )(x_mm, w1p, b1p, w2p, b2p, w3p, b3p)

    # Lane-dense (.,128) stores inside the kernel; cheap slice back to D_out here.
    return out_padded[:, :D_out]


def init_params(key, input_size, hidden_size, output_size, dtype=jnp.float32):
    """Deterministic PyTorch-Linear-style init (uniform +/- 1/sqrt(fan_in))."""
    ks = jax.random.split(key, 6)

    def linear(kw, kb, fan_in, fan_out):
        bound = 1.0 / jnp.sqrt(fan_in)
        w = jax.random.uniform(kw, (fan_in, fan_out), dtype, -bound, bound)
        b = jax.random.uniform(kb, (1, fan_out), dtype, -bound, bound)
        return w, b

    w1, b1 = linear(ks[0], ks[1], input_size, hidden_size)
    w2, b2 = linear(ks[2], ks[3], hidden_size, 50)
    w3, b3 = linear(ks[4], ks[5], 50, output_size)
    return w1, b1, w2, b2, w3, b3


def _reference(x, params):
    w1, b1, w2, b2, w3, b3 = params
    h = jnp.maximum(x @ w1 + b1, 0.0)
    h = jnp.maximum(h @ w2 + b2, 0.0)
    return h @ w3 + b3


if __name__ == "__main__":
    INPUT_SIZE, HIDDEN_SIZE, OUTPUT_SIZE = 32, 64, 16
    BATCH = 8

    key = jax.random.PRNGKey(0)
    k_x, k_p, k_x2 = jax.random.split(key, 3)

    params = init_params(k_p, INPUT_SIZE, HIDDEN_SIZE, OUTPUT_SIZE)

    # Small batch: single grid step covering the whole batch.
    x = jax.random.normal(k_x, (BATCH, INPUT_SIZE), dtype=jnp.float32)
    out = jax.block_until_ready(mlp_forward(x, *params))
    ref = _reference(x, params)
    assert out.shape == (BATCH, OUTPUT_SIZE)
    assert jnp.allclose(out, ref, atol=1e-5, rtol=1e-5)

    # Larger batch: exercises the tiled (multi-step) grid path.
    x2 = jax.random.normal(k_x2, (1024, INPUT_SIZE), dtype=jnp.float32)
    out2 = jax.block_until_ready(mlp_forward(x2, *params, block_b=512))
    ref2 = _reference(x2, params)
    assert out2.shape == (1024, OUTPUT_SIZE)
    assert jnp.allclose(out2, ref2, atol=1e-5, rtol=1e-5)

    print("KERNEL_OK")
</pallas_src>

<mosaic_0001>
module attributes {stable_mosaic.version = 11 : i64} {
  func.func @_mlp_kernel(%arg0: i32, %arg1: memref<8x32xf32, #tpu.memory_space<vmem>>, %arg2: memref<32x128xf32, #tpu.memory_space<vmem>>, %arg3: memref<1x128xf32, #tpu.memory_space<vmem>>, %arg4: memref<128x128xf32, #tpu.memory_space<vmem>>, %arg5: memref<1x128xf32, #tpu.memory_space<vmem>>, %arg6: memref<128x128xf32, #tpu.memory_space<vmem>>, %arg7: memref<1x128xf32, #tpu.memory_space<vmem>>, %arg8: memref<8x128xf32, #tpu.memory_space<vmem>>) attributes {dimension_semantics = [#tpu.dimension_semantics<parallel>], iteration_bounds = array<i64: 1>, scalar_prefetch = 0 : i64, scratch_operands = 0 : i64, tpu.core_type = #tpu.core_type<tc>, window_params = [{transform_indices = @transform_0, window_bounds = array<i64: 8, 32>}, {pipeline_mode = #tpu.pipeline_mode<synchronous>, transform_indices = @transform_1, window_bounds = array<i64: 32, 128>}, {pipeline_mode = #tpu.pipeline_mode<synchronous>, transform_indices = @transform_2, window_bounds = array<i64: 1, 128>}, {pipeline_mode = #tpu.pipeline_mode<synchronous>, transform_indices = @transform_3, window_bounds = array<i64: 128, 128>}, {pipeline_mode = #tpu.pipeline_mode<synchronous>, transform_indices = @transform_4, window_bounds = array<i64: 1, 128>}, {pipeline_mode = #tpu.pipeline_mode<synchronous>, transform_indices = @transform_5, window_bounds = array<i64: 128, 128>}, {pipeline_mode = #tpu.pipeline_mode<synchronous>, transform_indices = @transform_6, window_bounds = array<i64: 1, 128>}, {transform_indices = @transform_7, window_bounds = array<i64: 8, 128>}]} {
    %c0 = arith.constant 0 : index
    %c0_0 = arith.constant 0 : index
    %0 = vector.load %arg1[%c0, %c0_0] : memref<8x32xf32, #tpu.memory_space<vmem>>, vector<8x32xf32>
    %c0_1 = arith.constant 0 : index
    %c0_2 = arith.constant 0 : index
    %1 = vector.load %arg2[%c0_1, %c0_2] : memref<32x128xf32, #tpu.memory_space<vmem>>, vector<32x128xf32>
    %cst = arith.constant dense<0.000000e+00> : vector<8x128xf32>
    %2 = tpu.matmul %0, %1, %cst {dimension_numbers = #tpu.dot_dimension_numbers<[1], [0], [0], [1], [0, 0, 1, 1], [], []>} : vector<8x32xf32>, vector<32x128xf32>, vector<8x128xf32> -> vector<8x128xf32>
    %c0_3 = arith.constant 0 : index
    %c0_4 = arith.constant 0 : index
    %3 = vector.load %arg3[%c0_3, %c0_4] : memref<1x128xf32, #tpu.memory_space<vmem>>, vector<1x128xf32>
    %4 = vector.broadcast %3 : vector<1x128xf32> to vector<8x128xf32>
    %5 = arith.addf %2, %4 : vector<8x128xf32>
    %cst_5 = arith.constant 0.000000e+00 : f32
    %6 = vector.broadcast %cst_5 : f32 to vector<8x128xf32>
    %7 = arith.maximumf %5, %6 : vector<8x128xf32>
    %c0_6 = arith.constant 0 : index
    %c0_7 = arith.constant 0 : index
    %8 = vector.load %arg4[%c0_6, %c0_7] : memref<128x128xf32, #tpu.memory_space<vmem>>, vector<128x128xf32>
    %cst_8 = arith.constant dense<0.000000e+00> : vector<8x128xf32>
    %9 = tpu.matmul %7, %8, %cst_8 {dimension_numbers = #tpu.dot_dimension_numbers<[1], [0], [0], [1], [0, 0, 1, 1], [], []>} : vector<8x128xf32>, vector<128x128xf32>, vector<8x128xf32> -> vector<8x128xf32>
    %c0_9 = arith.constant 0 : index
    %c0_10 = arith.constant 0 : index
    %10 = vector.load %arg5[%c0_9, %c0_10] : memref<1x128xf32, #tpu.memory_space<vmem>>, vector<1x128xf32>
    %11 = vector.broadcast %10 : vector<1x128xf32> to vector<8x128xf32>
    %12 = arith.addf %9, %11 : vector<8x128xf32>
    %cst_11 = arith.constant 0.000000e+00 : f32
    %13 = vector.broadcast %cst_11 : f32 to vector<8x128xf32>
    %14 = arith.maximumf %12, %13 : vector<8x128xf32>
    %c0_12 = arith.constant 0 : index
    %c0_13 = arith.constant 0 : index
    %15 = vector.load %arg6[%c0_12, %c0_13] : memref<128x128xf32, #tpu.memory_space<vmem>>, vector<128x128xf32>
    %cst_14 = arith.constant dense<0.000000e+00> : vector<8x128xf32>
    %16 = tpu.matmul %14, %15, %cst_14 {dimension_numbers = #tpu.dot_dimension_numbers<[1], [0], [0], [1], [0, 0, 1, 1], [], []>} : vector<8x128xf32>, vector<128x128xf32>, vector<8x128xf32> -> vector<8x128xf32>
    %c0_15 = arith.constant 0 : index
    %c0_16 = arith.constant 0 : index
    %17 = vector.load %arg7[%c0_15, %c0_16] : memref<1x128xf32, #tpu.memory_space<vmem>>, vector<1x128xf32>
    %18 = vector.broadcast %17 : vector<1x128xf32> to vector<8x128xf32>
    %19 = arith.addf %16, %18 : vector<8x128xf32>
    %c0_17 = arith.constant 0 : index
    %c0_18 = arith.constant 0 : index
    %20 = vector.load %arg8[%c0_17, %c0_18] : memref<8x128xf32, #tpu.memory_space<vmem>>, vector<8x128xf32>
    tpu.vector_store %arg8[%c0_17, %c0_18], %19 {strides = array<i32>} : memref<8x128xf32, #tpu.memory_space<vmem>>, vector<8x128xf32>,
    return
  }
  func.func @transform_0(%arg0: i32) -> (i32, i32) {
    %c0_i32 = arith.constant 0 : i32
    %c0_i32_0 = arith.constant 0 : i32
    return %arg0, %c0_i32 : i32, i32
  }
  func.func @transform_1(%arg0: i32) -> (i32, i32) {
    %c0_i32 = arith.constant 0 : i32
    %c0_i32_0 = arith.constant 0 : i32
    %c0_i32_1 = arith.constant 0 : i32
    return %c0_i32, %c0_i32_0 : i32, i32
  }
  func.func @transform_2(%arg0: i32) -> (i32, i32) {
    %c0_i32 = arith.constant 0 : i32
    %c0_i32_0 = arith.constant 0 : i32
    %c0_i32_1 = arith.constant 0 : i32
    return %c0_i32, %c0_i32_0 : i32, i32
  }
  func.func @transform_3(%arg0: i32) -> (i32, i32) {
    %c0_i32 = arith.constant 0 : i32
    %c0_i32_0 = arith.constant 0 : i32
    %c0_i32_1 = arith.constant 0 : i32
    return %c0_i32, %c0_i32_0 : i32, i32
  }
  func.func @transform_4(%arg0: i32) -> (i32, i32) {
    %c0_i32 = arith.constant 0 : i32
    %c0_i32_0 = arith.constant 0 : i32
    %c0_i32_1 = arith.constant 0 : i32
    return %c0_i32, %c0_i32_0 : i32, i32
  }
  func.func @transform_5(%arg0: i32) -> (i32, i32) {
    %c0_i32 = arith.constant 0 : i32
    %c0_i32_0 = arith.constant 0 : i32
    %c0_i32_1 = arith.constant 0 : i32
    return %c0_i32, %c0_i32_0 : i32, i32
  }
  func.func @transform_6(%arg0: i32) -> (i32, i32) {
    %c0_i32 = arith.constant 0 : i32
    %c0_i32_0 = arith.constant 0 : i32
    %c0_i32_1 = arith.constant 0 : i32
    return %c0_i32, %c0_i32_0 : i32, i32
  }
  func.func @transform_7(%arg0: i32) -> (i32, i32) {
    %c0_i32 = arith.constant 0 : i32
    %c0_i32_0 = arith.constant 0 : i32
    return %arg0, %c0_i32 : i32, i32
  }
}

</mosaic_0001>

<llo_original>
// kernel: mlp_forward.1
$region0: #{mlp_forward.1}
  #allocation0 [shape = 'u32[]', space=smem, size = 0x4, offset = 0x4, fixed_abs, tag = 'smem constant byte address 0x4 - core index']
  #allocation1 [shape = 'u32[144,128]{1,0:T(1,128)}', space=vmem, size = 0x12000, scoped, tag = 'internal scratch']
  %s0 = inlined_call_operand.vmem [shape: f32[8,32], index: 0, kind: input, shape index: {}]
  %s1 = inlined_call_operand.vmem [shape: f32[32,128], index: 1, kind: input, shape index: {}]
  %s2 = inlined_call_operand.vmem [shape: f32[1,128], index: 2, kind: input, shape index: {}]
  %s3 = inlined_call_operand.vmem [shape: f32[128,128], index: 3, kind: input, shape index: {}]
  %s4 = inlined_call_operand.vmem [shape: f32[1,128], index: 4, kind: input, shape index: {}]
  %s5 = inlined_call_operand.vmem [shape: f32[128,128], index: 5, kind: input, shape index: {}]
  %s6 = inlined_call_operand.vmem [shape: f32[1,128], index: 6, kind: input, shape index: {}]
  %s7 = inlined_call_operand.hbm [shape: f32[8,128], index: 7, kind: output, shape index: {}]
  %s8 = sld [smem:[#allocation0]]
  $region38: #{mlp_forward.1} parent=0
    _
  %s10 = ssub.s32 1, %s8
  %s11 = scalar_select 0, %s10, %s8
  $region1: #{mlp_forward.1} parent=0
    #allocation2 [shape = 'u8[4096]{0}', space=vmem, size = 0x1000, scoped, tag = 'output window, operand 0, single buffered']
    #allocation3 [shape = 's32[1]{0}', space=sflag, size = 0x4, scoped, tag = 'scoped memory for mlp_forward.1']
    %12 = vsyncpa [#allocation3], 0
    // Predicated region
    $region2: #{mlp_forward.1} parent=1 // pred_check
      _
    $region3: #{mlp_forward.1} parent=1 // pred_check_branch
      %14 = sbr.rel (0) target = $region5
    $region4: #{mlp_forward.1} parent=1 // pred_region
      _
    $region5: #{mlp_forward.1} parent=1 // pred_fallthru
      _
    // Predicated region
    $region6: #{mlp_forward.1} parent=1 // pred_check
      _
    $region7: #{mlp_forward.1} parent=1 // pred_check_branch
      %16 = sbr.rel (0) target = $region9
    $region8: #{mlp_forward.1} parent=1 // pred_region
      _
    $region9: #{mlp_forward.1} parent=1 // pred_fallthru
      _
    // Predicated region
    $region10: #{mlp_forward.1} parent=1 // pred_check
      _
    $region11: #{mlp_forward.1} parent=1 // pred_check_branch
      %18 = sbr.rel (0) target = $region13
    $region12: #{mlp_forward.1} parent=1 // pred_region
      _
    $region13: #{mlp_forward.1} parent=1 // pred_fallthru
      _
    // Predicated region
    $region14: #{mlp_forward.1} parent=1 // pred_check
      _
    $region15: #{mlp_forward.1} parent=1 // pred_check_branch
      %20 = sbr.rel (0) target = $region17
    $region16: #{mlp_forward.1} parent=1 // pred_region
      _
    $region17: #{mlp_forward.1} parent=1 // pred_fallthru
      _
    // Predicated region
    $region18: #{mlp_forward.1} parent=1 // pred_check
      _
    $region19: #{mlp_forward.1} parent=1 // pred_check_branch
      %22 = sbr.rel (0) target = $region21
    $region20: #{mlp_forward.1} parent=1 // pred_region
      _
    $region21: #{mlp_forward.1} parent=1 // pred_fallthru
      _
    // Predicated region
    $region22: #{mlp_forward.1} parent=1 // pred_check
      _
    $region23: #{mlp_forward.1} parent=1 // pred_check_branch
      %24 = sbr.rel (0) target = $region25
    $region24: #{mlp_forward.1} parent=1 // pred_region
      _
    $region25: #{mlp_forward.1} parent=1 // pred_fallthru
      _
    // Predicated region
    $region26: #{mlp_forward.1} parent=1 // pred_check
      _
    $region27: #{mlp_forward.1} parent=1 // pred_check_branch
      %26 = sbr.rel (0) target = $region29
    $region28: #{mlp_forward.1} parent=1 // pred_region
      _
    $region29: #{mlp_forward.1} parent=1 // pred_fallthru
      _
    %v27 = vld [vmem:[%s0] sm:$0xff]
    %v28 = vld [vmem:[%s1] sm:$0xff]
    %v29 = vld [vmem:[%s1 + $0x8] sm:$0xff]
    %v30 = vld [vmem:[%s1 + $0x10] sm:$0xff]
    %v31 = vld [vmem:[%s1 + $0x18] sm:$0xff]
    %v32 = vld [vmem:[%s2] sm:$0x1]
    %v34 = vlaneseq
    %v35 = vshrl.u32 %v34, 7
    %v36 = vsub.s32 0, %v35
    %v37 = vrot.slane %v32, %v36
    %vm39 = vcmask 261120
    %v41 = vsel %vm39, %v27, 0
    %43 = vmatprep.subr.mxu0 0.0
    %44 = vmatpush1.msra.mxu0 0.0
    %45 = vmatprep.subr.mxu0 0.0
    %46 = vmatpush1.msra.mxu0 0.0
    %47 = vmatprep.subr.mxu0 0.0
    %48 = vmatpush1.msra.mxu0 0.0
    %49 = vmatprep.subr.mxu0 0.0
    %50 = vmatpush1.msra.mxu0 0.0
    %51 = vmatprep.subr.mxu0 0.0
    %52 = vmatpush1.msra.mxu0 0.0
    %53 = vmatprep.subr.mxu0 0.0
    %54 = vmatpush1.msra.mxu0 0.0
    %55 = vmatprep.subr.mxu0 0.0
    %56 = vmatpush1.msra.mxu0 0.0
    %57 = vmatprep.subr.mxu0 0.0
    %58 = vmatpush1.msra.mxu0 0.0
    %59 = vmatprep.subr.mxu0 0.0
    %60 = vmatpush1.msra.mxu0 0.0
    %61 = vmatprep.subr.mxu0 0.0
    %62 = vmatpush1.msra.mxu0 0.0
    %63 = vmatprep.subr.mxu0 0.0
    %64 = vmatpush1.msra.mxu0 0.0
    %65 = vmatprep.subr.mxu0 0.0
    %66 = vmatpush1.msra.mxu0 0.0
    %67 = vmatprep.subr.mxu0 0.0
    %68 = vmatpush1.msra.mxu0 %v31
    %69 = vmatprep.subr.mxu0 0.0
    %70 = vmatpush1.msra.mxu0 %v30
    %71 = vmatprep.subr.mxu0 0.0
    %72 = vmatpush1.msra.mxu0 %v29
    %73 = vmatprep.subr.mxu0 0.0
    %74 = vmatpush1.msra.mxu0 %v28
    %75 = vmatprep.subr.mxu0 0.0
    %76 = vmatpush2.msra.mxu0 0.0
    %77 = vmatprep.subr.mxu0 0.0
    %78 = vmatpush2.msra.mxu0 0.0
    %79 = vmatprep.subr.mxu0 0.0
    %80 = vmatpush2.msra.mxu0 0.0
    %81 = vmatprep.subr.mxu0 0.0
    %82 = vmatpush2.msra.mxu0 0.0
    %83 = vmatprep.subr.mxu0 0.0
    %84 = vmatpush2.msra.mxu0 0.0
    %85 = vmatprep.subr.mxu0 0.0
    %86 = vmatpush2.msra.mxu0 0.0
    %87 = vmatprep.subr.mxu0 0.0
    %88 = vmatpush2.msra.mxu0 0.0
    %89 = vmatprep.subr.mxu0 0.0
    %90 = vmatpush2.msra.mxu0 0.0
    %91 = vmatprep.subr.mxu0 0.0
    %92 = vmatpush2.msra.mxu0 0.0
    %93 = vmatprep.subr.mxu0 0.0
    %94 = vmatpush2.msra.mxu0 0.0
    %95 = vmatprep.subr.mxu0 0.0
    %96 = vmatpush2.msra.mxu0 0.0
    %97 = vmatprep.subr.mxu0 0.0
    %98 = vmatpush2.msra.mxu0 0.0
    %99 = vmatprep.subr.mxu0 0.0
    %100 = vmatpush2.msra.mxu0 0.0
    %101 = vmatprep.subr.mxu0 0.0
    %102 = vmatpush2.msra.mxu0 0.0
    %103 = vmatprep.subr.mxu0 0.0
    %104 = vmatpush2.msra.mxu0 0.0
    %105 = vmatprep.subr.mxu0 0.0
    %106 = vmatpush2.msra.mxu0 0.0
    %107 = vmatprep.mubr.f32.mxu0 0.0
    %108 = vmatmul.mubr.f32.gmra.mxu0 %v41
    %v109 = vpop.f32.mrf.mxu0
    %v110 = vadd.f32 %v37, %v109
    %v111 = vpop.f32.mrf.mxu0
    %112 = vdwg.mxu0
    %v113 = vmax.f32 %v110, 0.0
    %v114 = vld [vmem:[%s3] sm:$0xff]
    %v115 = vld [vmem:[%s3 + $0x8] sm:$0xff]
    %v116 = vld [vmem:[%s3 + $0x10] sm:$0xff]
    %v117 = vld [vmem:[%s3 + $0x18] sm:$0xff]
    %v118 = vld [vmem:[%s3 + $0x20] sm:$0xff]
    %v119 = vld [vmem:[%s3 + $0x28] sm:$0xff]
    %v120 = vld [vmem:[%s3 + $0x30] sm:$0xff]
    %v121 = vld [vmem:[%s3 + $0x38] sm:$0xff]
    %v122 = vld [vmem:[%s3 + $0x40] sm:$0xff]
    %v123 = vld [vmem:[%s3 + $0x48] sm:$0xff]
    %v124 = vld [vmem:[%s3 + $0x50] sm:$0xff]
    %v125 = vld [vmem:[%s3 + $0x58] sm:$0xff]
    %v126 = vld [vmem:[%s3 + $0x60] sm:$0xff]
    %v127 = vld [vmem:[%s3 + $0x68] sm:$0xff]
    %v128 = vld [vmem:[%s3 + $0x70] sm:$0xff]
    %v129 = vld [vmem:[%s3 + $0x78] sm:$0xff]
    %v130 = vld [vmem:[%s4] sm:$0x1]
    %v132 = vlaneseq
    %v133 = vshrl.u32 %v132, 7
    %v134 = vsub.s32 0, %v133
    %v135 = vrot.slane %v130, %v134
    %137 = vmatprep.subr.mxu0 0.0
    %138 = vmatpush1.msra.mxu0 %v129
    %139 = vmatprep.subr.mxu0 0.0
    %140 = vmatpush1.msra.mxu0 %v128
    %141 = vmatprep.subr.mxu0 0.0
    %142 = vmatpush1.msra.mxu0 %v127
    %143 = vmatprep.subr.mxu0 0.0
    %144 = vmatpush1.msra.mxu0 %v126
    %145 = vmatprep.subr.mxu0 0.0
    %146 = vmatpush1.msra.mxu0 %v125
    %147 = vmatprep.subr.mxu0 0.0
    %148 = vmatpush1.msra.mxu0 %v124
    %149 = vmatprep.subr.mxu0 0.0
    %150 = vmatpush1.msra.mxu0 %v123
    %151 = vmatprep.subr.mxu0 0.0
    %152 = vmatpush1.msra.mxu0 %v122
    %153 = vmatprep.subr.mxu0 0.0
    %154 = vmatpush1.msra.mxu0 %v121
    %155 = vmatprep.subr.mxu0 0.0
    %156 = vmatpush1.msra.mxu0 %v120
    %157 = vmatprep.subr.mxu0 0.0
    %158 = vmatpush1.msra.mxu0 %v119
    %159 = vmatprep.subr.mxu0 0.0
    %160 = vmatpush1.msra.mxu0 %v118
    %161 = vmatprep.subr.mxu0 0.0
    %162 = vmatpush1.msra.mxu0 %v117
    %163 = vmatprep.subr.mxu0 0.0
    %164 = vmatpush1.msra.mxu0 %v116
    %165 = vmatprep.subr.mxu0 0.0
    %166 = vmatpush1.msra.mxu0 %v115
    %167 = vmatprep.subr.mxu0 0.0
    %168 = vmatpush1.msra.mxu0 %v114
    %169 = vmatprep.subr.mxu0 0.0
    %170 = vmatpush2.msra.mxu0 0.0
    %171 = vmatprep.subr.mxu0 0.0
    %172 = vmatpush2.msra.mxu0 0.0
    %173 = vmatprep.subr.mxu0 0.0
    %174 = vmatpush2.msra.mxu0 0.0
    %175 = vmatprep.subr.mxu0 0.0
    %176 = vmatpush2.msra.mxu0 0.0
    %177 = vmatprep.subr.mxu0 0.0
    %178 = vmatpush2.msra.mxu0 0.0
    %179 = vmatprep.subr.mxu0 0.0
    %180 = vmatpush2.msra.mxu0 0.0
    %181 = vmatprep.subr.mxu0 0.0
    %182 = vmatpush2.msra.mxu0 0.0
    %183 = vmatprep.subr.mxu0 0.0
    %184 = vmatpush2.msra.mxu0 0.0
    %185 = vmatprep.subr.mxu0 0.0
    %186 = vmatpush2.msra.mxu0 0.0
    %187 = vmatprep.subr.mxu0 0.0
    %188 = vmatpush2.msra.mxu0 0.0
    %189 = vmatprep.subr.mxu0 0.0
    %190 = vmatpush2.msra.mxu0 0.0
    %191 = vmatprep.subr.mxu0 0.0
    %192 = vmatpush2.msra.mxu0 0.0
    %193 = vmatprep.subr.mxu0 0.0
    %194 = vmatpush2.msra.mxu0 0.0
    %195 = vmatprep.subr.mxu0 0.0
    %196 = vmatpush2.msra.mxu0 0.0
    %197 = vmatprep.subr.mxu0 0.0
    %198 = vmatpush2.msra.mxu0 0.0
    %199 = vmatprep.subr.mxu0 0.0
    %200 = vmatpush2.msra.mxu0 0.0
    %201 = vmatprep.mubr.f32.mxu0 0.0
    %202 = vmatmul.mubr.f32.gmra.mxu0 %v113
    %v203 = vpop.f32.mrf.mxu0
    %v204 = vadd.f32 %v135, %v203
    %v205 = vpop.f32.mrf.mxu0
    %206 = vdwg.mxu0
    %v207 = vmax.f32 %v204, 0.0
    %v208 = vld [vmem:[%s5] sm:$0xff]
    %v209 = vld [vmem:[%s5 + $0x8] sm:$0xff]
    %v210 = vld [vmem:[%s5 + $0x10] sm:$0xff]
    %v211 = vld [vmem:[%s5 + $0x18] sm:$0xff]
    %v212 = vld [vmem:[%s5 + $0x20] sm:$0xff]
    %v213 = vld [vmem:[%s5 + $0x28] sm:$0xff]
    %v214 = vld [vmem:[%s5 + $0x30] sm:$0xff]
    %v215 = vld [vmem:[%s5 + $0x38] sm:$0xff]
    %v216 = vld [vmem:[%s5 + $0x40] sm:$0xff]
    %v217 = vld [vmem:[%s5 + $0x48] sm:$0xff]
    %v218 = vld [vmem:[%s5 + $0x50] sm:$0xff]
    %v219 = vld [vmem:[%s5 + $0x58] sm:$0xff]
    %v220 = vld [vmem:[%s5 + $0x60] sm:$0xff]
    %v221 = vld [vmem:[%s5 + $0x68] sm:$0xff]
    %v222 = vld [vmem:[%s5 + $0x70] sm:$0xff]
    %v223 = vld [vmem:[%s5 + $0x78] sm:$0xff]
    %v224 = vld [vmem:[%s6] sm:$0x1]
    %v226 = vlaneseq
    %v227 = vshrl.u32 %v226, 7
    %v228 = vsub.s32 0, %v227
    %v229 = vrot.slane %v224, %v228
    %231 = vmatprep.subr.mxu0 0.0
    %232 = vmatpush1.msra.mxu0 %v223
    %233 = vmatprep.subr.mxu0 0.0
    %234 = vmatpush1.msra.mxu0 %v222
    %235 = vmatprep.subr.mxu0 0.0
    %236 = vmatpush1.msra.mxu0 %v221
    %237 = vmatprep.subr.mxu0 0.0
    %238 = vmatpush1.msra.mxu0 %v220
    %239 = vmatprep.subr.mxu0 0.0
    %240 = vmatpush1.msra.mxu0 %v219
    %241 = vmatprep.subr.mxu0 0.0
    %242 = vmatpush1.msra.mxu0 %v218
    %243 = vmatprep.subr.mxu0 0.0
    %244 = vmatpush1.msra.mxu0 %v217
    %245 = vmatprep.subr.mxu0 0.0
    %246 = vmatpush1.msra.mxu0 %v216
    %247 = vmatprep.subr.mxu0 0.0
    %248 = vmatpush1.msra.mxu0 %v215
    %249 = vmatprep.subr.mxu0 0.0
    %250 = vmatpush1.msra.mxu0 %v214
    %251 = vmatprep.subr.mxu0 0.0
    %252 = vmatpush1.msra.mxu0 %v213
    %253 = vmatprep.subr.mxu0 0.0
    %254 = vmatpush1.msra.mxu0 %v212
    %255 = vmatprep.subr.mxu0 0.0
    %256 = vmatpush1.msra.mxu0 %v211
    %257 = vmatprep.subr.mxu0 0.0
    %258 = vmatpush1.msra.mxu0 %v210
    %259 = vmatprep.subr.mxu0 0.0
    %260 = vmatpush1.msra.mxu0 %v209
    %261 = vmatprep.subr.mxu0 0.0
    %262 = vmatpush1.msra.mxu0 %v208
    %263 = vmatprep.subr.mxu0 0.0
    %264 = vmatpush2.msra.mxu0 0.0
    %265 = vmatprep.subr.mxu0 0.0
    %266 = vmatpush2.msra.mxu0 0.0
    %267 = vmatprep.subr.mxu0 0.0
    %268 = vmatpush2.msra.mxu0 0.0
    %269 = vmatprep.subr.mxu0 0.0
    %270 = vmatpush2.msra.mxu0 0.0
    %271 = vmatprep.subr.mxu0 0.0
    %272 = vmatpush2.msra.mxu0 0.0
    %273 = vmatprep.subr.mxu0 0.0
    %274 = vmatpush2.msra.mxu0 0.0
    %275 = vmatprep.subr.mxu0 0.0
    %276 = vmatpush2.msra.mxu0 0.0
    %277 = vmatprep.subr.mxu0 0.0
    %278 = vmatpush2.msra.mxu0 0.0
    %279 = vmatprep.subr.mxu0 0.0
    %280 = vmatpush2.msra.mxu0 0.0
    %281 = vmatprep.subr.mxu0 0.0
    %282 = vmatpush2.msra.mxu0 0.0
    %283 = vmatprep.subr.mxu0 0.0
    %284 = vmatpush2.msra.mxu0 0.0
    %285 = vmatprep.subr.mxu0 0.0
    %286 = vmatpush2.msra.mxu0 0.0
    %287 = vmatprep.subr.mxu0 0.0
    %288 = vmatpush2.msra.mxu0 0.0
    %289 = vmatprep.subr.mxu0 0.0
    %290 = vmatpush2.msra.mxu0 0.0
    %291 = vmatprep.subr.mxu0 0.0
    %292 = vmatpush2.msra.mxu0 0.0
    %293 = vmatprep.subr.mxu0 0.0
    %294 = vmatpush2.msra.mxu0 0.0
    %295 = vmatprep.mubr.f32.mxu0 0.0
    %296 = vmatmul.mubr.f32.gmra.mxu0 %v207
    %v297 = vpop.f32.mrf.mxu0
    %v298 = vadd.f32 %v229, %v297
    %v299 = vpop.f32.mrf.mxu0
    %300 = vdwg.mxu0
    %301 = vst [vmem:[#allocation2] sm:$0xff] %v298
    // Predicated region
    $region30: #{mlp_forward.1} parent=1 // pred_check
      _
    $region31: #{mlp_forward.1} parent=1 // pred_check_branch
      %303 = sbr.rel (0) target = $region33
    $region32: #{mlp_forward.1} parent=1 // pred_region
      %s305 = ssub.s32 128, 128
      %306 = vsyncadd [#allocation3], %s305
      %s308 = sshll.u32 [#allocation2], 4
      %s309 = int_to_ptr.vmem [resolvable:$true] %s308
      %311 = dma.vmem_to_hbm [thread:$0]  %s309, 128, %s7, [#allocation3]
    $region33: #{mlp_forward.1} parent=1 // pred_fallthru
      _
    // Predicated region
    $region34: #{mlp_forward.1} parent=1 // pred_check
      _
    $region35: #{mlp_forward.1} parent=1 // pred_check_branch
      %313 = sbr.rel (0) target = $region37
    $region36: #{mlp_forward.1} parent=1 // pred_region
      %314 = dma.done [#allocation3], 128
    $region37: #{mlp_forward.1} parent=1 // pred_fallthru
      _
    %315 = vsyncpa [#allocation3], 1

</llo_original>
